<compile_context>
chip_gen: v7x
topology: tpu7x:2x2x1
jax: 0.10.0
libtpu: 0.0.40
codegen_flags: <defaults>
</compile_context>

<pallas_src>
import jax
import jax.numpy as jnp
from jax.experimental import pallas as pl
from jax.experimental.pallas import tpu as pltpu


def _scaling_kernel(a_ref, b_ref, x_ref, o_ref):
    # a_ref / b_ref: (ROWS, 1) f32 per-row constants; x_ref / o_ref: (ROWS, TILE_C).
    x = x_ref[...].astype(jnp.float32)
    o_ref[...] = (x * a_ref[...] + b_ref[...]).astype(o_ref.dtype)


def scaling_layer(x: jax.Array) -> jax.Array:
    """Apply (x - shift) / scale per channel.  x is NCHW with C == 3."""
    n, c, h, w = x.shape
    assert c == 3, "ScalingLayer is defined for 3 channels (RGB)."

    # Deterministic buffers from the module's __init__ (not learned).
    shift = jnp.array([-0.030, -0.088, -0.188], dtype=jnp.float32)
    scale = jnp.array([0.458, 0.448, 0.450], dtype=jnp.float32)
    a = 1.0 / scale            # multiply instead of divide
    b = -shift / scale         # folded shift

    nc = n * c
    hw = h * w

    # Split each (batch, channel) row into k sub-rows so ROWS % 8 == 0 when
    # possible (full sublane density).  The reshape stays contiguous (free).
    k = 1
    for cand in (1, 2, 4, 8):
        if (nc * cand) % 8 == 0 and hw % cand == 0:
            k = cand
            break
    rows = nc * k
    cols = hw // k

    # Per-row constants: row r corresponds to channel (r // k) % 3.
    a_rows = jnp.repeat(jnp.tile(a, n), k)[:, None]   # (ROWS, 1) f32
    b_rows = jnp.repeat(jnp.tile(b, n), k)[:, None]   # (ROWS, 1) f32
    x2d = x.reshape(rows, cols)                        # contiguous view

    # Column tile: ~2 MiB per block, last dim a multiple of 128 (unmasked vst),
    # or full-extent if the spatial axis already fits in one block.
    itemsize = jnp.dtype(x.dtype).itemsize
    target_block_bytes = 2 << 20
    tile_c = max(128, (target_block_bytes // (rows * itemsize)) // 128 * 128)
    if tile_c >= cols:
        tile_c = cols                                  # full dim (exempt from /128 rule)

    grid = (pl.cdiv(cols, tile_c),)

    grid_spec = pltpu.PrefetchScalarGridSpec(
        num_scalar_prefetch=0,
        grid=grid,
        in_specs=[
            pl.BlockSpec((rows, 1), lambda j: (0, 0)),        # a_rows (tiny, resident)
            pl.BlockSpec((rows, 1), lambda j: (0, 0)),        # b_rows
            pl.BlockSpec((rows, tile_c), lambda j: (0, j)),   # x tile
        ],
        out_specs=pl.BlockSpec((rows, tile_c), lambda j: (0, j)),
    )

    out2d = pl.pallas_call(
        _scaling_kernel,
        out_shape=jax.ShapeDtypeStruct((rows, cols), x.dtype),
        grid_spec=grid_spec,
        compiler_params=pltpu.CompilerParams(
            dimension_semantics=("parallel",),
        ),
    )(a_rows, b_rows, x2d)

    return out2d.reshape(n, c, h, w)


if __name__ == "__main__":
    key = jax.random.PRNGKey(0)
    x = jax.random.uniform(key, (2, 3, 16, 16), dtype=jnp.float32,
                           minval=-1.0, maxval=1.0)

    out = scaling_layer(x)
    out = jax.block_until_ready(out)

    # Reference check in plain JAX (same math as the PyTorch module).
    shift = jnp.array([-0.030, -0.088, -0.188], dtype=jnp.float32)[None, :, None, None]
    scale = jnp.array([0.458, 0.448, 0.450], dtype=jnp.float32)[None, :, None, None]
    ref = (x - shift) / scale

    assert out.shape == x.shape and out.dtype == x.dtype
    # reciprocal-multiply rewrite => slightly looser tolerance than exact divide
    assert jnp.allclose(out, ref, rtol=1e-5, atol=1e-6)
    print("KERNEL_OK")
</pallas_src>

<mosaic_0001>
module attributes {stable_mosaic.version = 11 : i64} {
  func.func @_scaling_kernel(%arg0: i32, %arg1: memref<24x1xf32, #tpu.memory_space<vmem>>, %arg2: memref<24x1xf32, #tpu.memory_space<vmem>>, %arg3: memref<24x64xf32, #tpu.memory_space<vmem>>, %arg4: memref<24x64xf32, #tpu.memory_space<vmem>>) attributes {dimension_semantics = [#tpu.dimension_semantics<parallel>], iteration_bounds = array<i64: 1>, scalar_prefetch = 0 : i64, scratch_operands = 0 : i64, tpu.core_type = #tpu.core_type<tc>, window_params = [{pipeline_mode = #tpu.pipeline_mode<synchronous>, transform_indices = @transform_0, window_bounds = array<i64: 24, 1>}, {pipeline_mode = #tpu.pipeline_mode<synchronous>, transform_indices = @transform_1, window_bounds = array<i64: 24, 1>}, {transform_indices = @transform_2, window_bounds = array<i64: 24, 64>}, {transform_indices = @transform_3, window_bounds = array<i64: 24, 64>}]} {
    %c0 = arith.constant 0 : index
    %c0_0 = arith.constant 0 : index
    %0 = vector.load %arg3[%c0, %c0_0] : memref<24x64xf32, #tpu.memory_space<vmem>>, vector<24x64xf32>
    %c0_1 = arith.constant 0 : index
    %c0_2 = arith.constant 0 : index
    %1 = vector.load %arg1[%c0_1, %c0_2] : memref<24x1xf32, #tpu.memory_space<vmem>>, vector<24x1xf32>
    %2 = vector.broadcast %1 : vector<24x1xf32> to vector<24x64xf32>
    %3 = arith.mulf %0, %2 : vector<24x64xf32>
    %c0_3 = arith.constant 0 : index
    %c0_4 = arith.constant 0 : index
    %4 = vector.load %arg2[%c0_3, %c0_4] : memref<24x1xf32, #tpu.memory_space<vmem>>, vector<24x1xf32>
    %5 = vector.broadcast %4 : vector<24x1xf32> to vector<24x64xf32>
    %6 = arith.addf %3, %5 : vector<24x64xf32>
    %c0_5 = arith.constant 0 : index
    %c0_6 = arith.constant 0 : index
    %7 = vector.load %arg4[%c0_5, %c0_6] : memref<24x64xf32, #tpu.memory_space<vmem>>, vector<24x64xf32>
    tpu.vector_store %arg4[%c0_5, %c0_6], %6 {strides = array<i32>} : memref<24x64xf32, #tpu.memory_space<vmem>>, vector<24x64xf32>,
    return
  }
  func.func @transform_0(%arg0: i32) -> (i32, i32) {
    %c0_i32 = arith.constant 0 : i32
    %c0_i32_0 = arith.constant 0 : i32
    %c0_i32_1 = arith.constant 0 : i32
    return %c0_i32, %c0_i32_0 : i32, i32
  }
  func.func @transform_1(%arg0: i32) -> (i32, i32) {
    %c0_i32 = arith.constant 0 : i32
    %c0_i32_0 = arith.constant 0 : i32
    %c0_i32_1 = arith.constant 0 : i32
    return %c0_i32, %c0_i32_0 : i32, i32
  }
  func.func @transform_2(%arg0: i32) -> (i32, i32) {
    %c0_i32 = arith.constant 0 : i32
    %c0_i32_0 = arith.constant 0 : i32
    return %c0_i32, %arg0 : i32, i32
  }
  func.func @transform_3(%arg0: i32) -> (i32, i32) {
    %c0_i32 = arith.constant 0 : i32
    %c0_i32_0 = arith.constant 0 : i32
    return %c0_i32, %arg0 : i32, i32
  }
}

</mosaic_0001>

<llo_original>
// kernel: tpu_custom_call.1
$region0: #{tpu_custom_call.1}
  #allocation0 [shape = 'u32[]', space=smem, size = 0x4, offset = 0x4, fixed_abs, tag = 'smem constant byte address 0x4 - core index']
  #allocation1 [shape = 'u32[144,128]{1,0:T(1,128)}', space=vmem, size = 0x12000, scoped, tag = 'internal scratch']
  %s0 = inlined_call_operand.vmem [shape: f32[24,1], index: 0, kind: input, shape index: {}]
  %s1 = inlined_call_operand.vmem [shape: f32[24,1], index: 1, kind: input, shape index: {}]
  %s2 = inlined_call_operand.vmem [shape: f32[24,64], index: 2, kind: input, shape index: {}]
  %s3 = inlined_call_operand.hbm [shape: f32[24,64], index: 3, kind: output, shape index: {}]
  %s4 = sld [smem:[#allocation0]]
  $region22: #{tpu_custom_call.1} parent=0
    _
  %s6 = ssub.s32 1, %s4
  %s7 = scalar_select 0, %s6, %s4
  $region1: #{tpu_custom_call.1} parent=0
    #allocation2 [shape = 'u8[12288]{0}', space=vmem, size = 0x3000, scoped, tag = 'output window, operand 0, single buffered']
    #allocation3 [shape = 's32[1]{0}', space=sflag, size = 0x4, scoped, tag = 'scoped memory for tpu_custom_call.1']
    %8 = vsyncpa [#allocation3], 0
    // Predicated region
    $region2: #{tpu_custom_call.1} parent=1 // pred_check
      _
    $region3: #{tpu_custom_call.1} parent=1 // pred_check_branch
      %10 = sbr.rel (0) target = $region5
    $region4: #{tpu_custom_call.1} parent=1 // pred_region
      _
    $region5: #{tpu_custom_call.1} parent=1 // pred_fallthru
      _
    // Predicated region
    $region6: #{tpu_custom_call.1} parent=1 // pred_check
      _
    $region7: #{tpu_custom_call.1} parent=1 // pred_check_branch
      %12 = sbr.rel (0) target = $region9
    $region8: #{tpu_custom_call.1} parent=1 // pred_region
      _
    $region9: #{tpu_custom_call.1} parent=1 // pred_fallthru
      _
    // Predicated region
    $region10: #{tpu_custom_call.1} parent=1 // pred_check
      _
    $region11: #{tpu_custom_call.1} parent=1 // pred_check_branch
      %14 = sbr.rel (0) target = $region13
    $region12: #{tpu_custom_call.1} parent=1 // pred_region
      _
    $region13: #{tpu_custom_call.1} parent=1 // pred_fallthru
      _
    %v15 = vld [vmem:[%s2] sm:$0xff]
    %v16 = vld [vmem:[%s2 + $0x8] sm:$0xff]
    %v17 = vld [vmem:[%s2 + $0x10] sm:$0xff]
    %v18 = vld [vmem:[%s0] sm:$0xff]
    %v19 = vld [vmem:[%s0 + $0x8] sm:$0xff]
    %v20 = vld [vmem:[%s0 + $0x10] sm:$0xff]
    %22 = vset.pattern.permute.xlu0 0
    %23 = vperm.xlu0 %22, %v18
    %v24 = vpop.permute.xlu0 %23
    %27 = vset.pattern.permute.xlu0 0
    %28 = vperm.xlu0 %27, %v19
    %v29 = vpop.permute.xlu0 %28
    %32 = vset.pattern.permute.xlu0 0
    %33 = vperm.xlu0 %32, %v20
    %v34 = vpop.permute.xlu0 %33
    %v36 = vmul.f32 %v15, %v24
    %v37 = vmul.f32 %v16, %v29
    %v38 = vmul.f32 %v17, %v34
    %v39 = vld [vmem:[%s1] sm:$0xff]
    %v40 = vld [vmem:[%s1 + $0x8] sm:$0xff]
    %v41 = vld [vmem:[%s1 + $0x10] sm:$0xff]
    %43 = vset.pattern.permute.xlu0 0
    %44 = vperm.xlu0 %43, %v39
    %v45 = vpop.permute.xlu0 %44
    %48 = vset.pattern.permute.xlu0 0
    %49 = vperm.xlu0 %48, %v40
    %v50 = vpop.permute.xlu0 %49
    %53 = vset.pattern.permute.xlu0 0
    %54 = vperm.xlu0 %53, %v41
    %v55 = vpop.permute.xlu0 %54
    %v57 = vadd.f32 %v36, %v45
    %v58 = vadd.f32 %v37, %v50
    %v59 = vadd.f32 %v38, %v55
    %vm60 = vcmask 523264
    %61 = vst.msk [vmem:[#allocation2] sm:$0xff] %vm60, %v57
    %62 = vst.msk [vmem:[#allocation2 + $0x8] sm:$0xff] %vm60, %v58
    %63 = vst.msk [vmem:[#allocation2 + $0x10] sm:$0xff] %vm60, %v59
    // Predicated region
    $region14: #{tpu_custom_call.1} parent=1 // pred_check
      _
    $region15: #{tpu_custom_call.1} parent=1 // pred_check_branch
      %65 = sbr.rel (0) target = $region17
    $region16: #{tpu_custom_call.1} parent=1 // pred_region
      %s67 = ssub.s32 384, 384
      %68 = vsyncadd [#allocation3], %s67
      %s69 = sshll.u32 [#allocation2], 4
      %s70 = int_to_ptr.vmem [resolvable:$true] %s69
      %75 = dma.vmem_to_hbm [thread:$0]  %s70, 384, %s3, [#allocation3], 128, 128, 8
    $region17: #{tpu_custom_call.1} parent=1 // pred_fallthru
      _
    // Predicated region
    $region18: #{tpu_custom_call.1} parent=1 // pred_check
      _
    $region19: #{tpu_custom_call.1} parent=1 // pred_check_branch
      %77 = sbr.rel (0) target = $region21
    $region20: #{tpu_custom_call.1} parent=1 // pred_region
      %78 = dma.done [#allocation3], 384
    $region21: #{tpu_custom_call.1} parent=1 // pred_fallthru
      _
    %79 = vsyncpa [#allocation3], 1

</llo_original>
